<compile_context>
chip_gen: v7x
topology: tpu7x:2x2x1
jax: 0.10.0
libtpu: 0.0.40
codegen_flags: <defaults>
</compile_context>

<pallas_src>
import jax
import jax.numpy as jnp
import numpy as np
from jax.experimental import pallas as pl
from jax.experimental.pallas import tpu as pltpu


def _mha_pool_kernel(x_ref, mbias_ref, wblk_ref, b_ref, vblk_ref,
                     exp_ref, wo_ref, bo_ref, out_ref):
    """One batch row per grid step (grid axis 0 = batch, marked "parallel").

    x_ref    : [1, S, D]  bf16  hidden states for this batch row
    mbias_ref: [1, S, H]  f32   additive mask bias (0 = valid, -1e9 = pad), lane-dense
    wblk_ref : [D, H*A]   bf16  block-diagonal fused per-head attention_linear weight
    b_ref    : [1, H*A]   f32   concatenated per-head attention_linear bias
    vblk_ref : [H*A, H]   bf16  block-diagonal per-head attention vectors
    exp_ref  : [H, D]     bf16  expands head h's weight over columns h*Dh:(h+1)*Dh
    wo_ref   : [D, D]     bf16  output projection weight (pre-transposed: y = pooled @ Wo)
    bo_ref   : [1, D]     f32   output projection bias
    out_ref  : [1, 1, D]  f32
    """
    x_bf = x_ref[0]                                                   # [S, D] bf16 (MXU)
    x_f32 = x_bf.astype(jnp.float32)                                  # f32 for elementwise

    # Fused per-head attention linears: one block-diagonal bf16 matmul (f32 acc) + tanh.
    ah = jnp.tanh(
        jnp.dot(x_bf, wblk_ref[...], preferred_element_type=jnp.float32)
        + b_ref[...])                                                 # [S, H*A] f32

    # All per-head scores at once + lane-dense additive mask bias.
    sc = (jnp.dot(ah.astype(jnp.bfloat16), vblk_ref[...],
                  preferred_element_type=jnp.float32)
          + mbias_ref[0])                                             # [S, H] f32

    # Softmax over S, independently per (batch, head).  The per-column max-shift makes
    # at least one exp equal 1, so denom >= 1: no NaN even for all-padded rows, which
    # then become uniform pooling exactly like the reference masked_fill + softmax.
    sc = sc - jnp.max(sc, axis=0, keepdims=True)
    e = jnp.exp(sc)                                                   # [S, H]
    denom = jnp.sum(e, axis=0, keepdims=True)                         # [1, H], >= 1
    wts = e * pl.reciprocal(denom, approx=True)                       # [S, H] (EUP recip)

    # Broadcast each head's weight over that head's hidden slice, pool over S.
    wts_full = jnp.dot(wts.astype(jnp.bfloat16), exp_ref[...],
                       preferred_element_type=jnp.float32)            # [S, D]
    pooled = jnp.sum(wts_full * x_f32, axis=0, keepdims=True)         # [1, D]

    # Output projection for this batch row (bf16 MXU, f32 acc + bias).
    out = (jnp.dot(pooled.astype(jnp.bfloat16), wo_ref[...],
                   preferred_element_type=jnp.float32)
           + bo_ref[...])                                             # [1, D]
    out_ref[0] = out.astype(out_ref.dtype)


def prepare_params(w_stack, b_stack, v_stack, wo_t, bo):
    """Parameter-only preprocessing.  Call ONCE at parameter-load time (it depends only
    on the weights), then reuse the returned dict for every forward call.

    w_stack: [H, Dh, A]; b_stack: [H, A]; v_stack: [H, A];
    wo_t: [D, D] (pre-transposed so y = pooled @ wo_t); bo: [D].
    """
    H, Dh, A = w_stack.shape
    D = H * Dh
    HA = H * A
    f32 = jnp.float32
    eyeH = jnp.eye(H, dtype=f32)

    # Block-diagonal fused attention weight: [D, H*A]; w_blk[h*Dh+i, h*A+j] = w_stack[h,i,j].
    w_blk = (eyeH[:, None, :, None] * w_stack.astype(f32)[:, :, None, :]).reshape(D, HA)
    # Block-diagonal attention vectors: [H*A, H]; v_blk[h*A+j, h] = v_stack[h, j].
    v_blk = (v_stack.astype(f32)[:, :, None] * eyeH[:, None, :]).reshape(HA, H)
    # Expansion matrix [H, D]: repeats head h's softmax weight over columns h*Dh:(h+1)*Dh.
    expand = (eyeH[:, :, None] * jnp.ones((1, 1, Dh), f32)).reshape(H, D)

    return {
        "w_blk": w_blk.astype(jnp.bfloat16),          # MXU operand -> bf16
        "b2": b_stack.astype(f32).reshape(1, HA),     # added post-acc -> f32
        "v_blk": v_blk.astype(jnp.bfloat16),
        "expand": expand.astype(jnp.bfloat16),
        "wo_t": wo_t.astype(jnp.bfloat16),
        "bo2": bo.astype(f32).reshape(1, D),
        "dims": (H, Dh, A),
    }


def multi_head_attention_pooling(x, mask, params):
    """x: [B, S, D]; mask: [B, S] (1 valid / 0 pad); params from prepare_params()."""
    B, S, D = x.shape
    H, Dh, A = params["dims"]
    HA = H * A
    assert D == H * Dh

    # Per-call data prep only: bf16 activations for the MXU and a lane-dense additive
    # mask bias [B, S, H] (0 = keep, -1e9 = pad; in f32 the -1e9 fully absorbs the raw
    # score, so all-padded rows reproduce the reference's uniform softmax).
    x_bf = x.astype(jnp.bfloat16)
    mbias = jnp.broadcast_to(
        ((mask.astype(jnp.float32) - 1.0) * 1e9)[:, :, None], (B, S, H))

    out = pl.pallas_call(
        _mha_pool_kernel,
        out_shape=jax.ShapeDtypeStruct((B, 1, D), jnp.float32),
        grid=(B,),
        in_specs=[
            pl.BlockSpec((1, S, D), lambda b: (b, 0, 0)),   # x (per-batch block)
            pl.BlockSpec((1, S, H), lambda b: (b, 0, 0)),   # mask bias (per-batch block)
            pl.BlockSpec((D, HA), lambda b: (0, 0)),        # params: same block every step
            pl.BlockSpec((1, HA), lambda b: (0, 0)),
            pl.BlockSpec((HA, H), lambda b: (0, 0)),
            pl.BlockSpec((H, D), lambda b: (0, 0)),
            pl.BlockSpec((D, D), lambda b: (0, 0)),
            pl.BlockSpec((1, D), lambda b: (0, 0)),
        ],
        out_specs=pl.BlockSpec((1, 1, D), lambda b: (b, 0, 0)),
        compiler_params=pltpu.CompilerParams(
            dimension_semantics=("parallel",)),             # shards across v7x's 2 TCs
    )(x_bf, mbias, params["w_blk"], params["b2"], params["v_blk"],
      params["expand"], params["wo_t"], params["bo2"])
    return out.reshape(B, D)


def reference(x, mask, w_stack, b_stack, v_stack, wo_t, bo):
    """Pure-JAX f32 reference matching the (intended) PyTorch forward in eval mode."""
    B, S, D = x.shape
    H, Dh, A = w_stack.shape
    outs = []
    for h in range(H):
        xh = x[:, :, h * Dh:(h + 1) * Dh]                            # [B, S, Dh]
        ah = jnp.tanh(jnp.einsum('bsd,da->bsa', xh, w_stack[h]) + b_stack[h])
        sc = jnp.einsum('bsa,a->bs', ah, v_stack[h])
        sc = jnp.where(mask == 0, -1e9, sc)                          # masked_fill
        wts = jax.nn.softmax(sc, axis=1)
        outs.append(jnp.einsum('bs,bsd->bd', wts, xh))
    cat = jnp.concatenate(outs, axis=-1)
    return cat @ wo_t + bo[None, :]


if __name__ == "__main__":
    # Shapes consistent with the module: hidden_dim=32, num_heads=8 -> head_dim=4,
    # attention_dim (default) = hidden_dim // num_heads = 4; batch=2, seq=8.
    B, S, D, H = 2, 8, 32, 8
    Dh = D // H
    A = D // H

    key = jax.random.PRNGKey(0)
    k_x, k_w, k_v, k_wo, k_bo = jax.random.split(key, 5)

    x = jax.random.normal(k_x, (B, S, D), dtype=jnp.float32)

    # attention mask: batch 0 fully valid; batch 1 last 3 positions padded
    mask = jnp.ones((B, S), dtype=jnp.float32)
    mask = mask.at[1, S - 3:].set(0.0)

    # Deterministic parameter init (synthetic; not a checkpoint load).
    limit = float(np.sqrt(6.0 / (Dh + A)))
    w_stack = jax.random.uniform(k_w, (H, Dh, A), minval=-limit, maxval=limit,
                                 dtype=jnp.float32)                      # xavier-uniform-like
    b_stack = jnp.zeros((H, A), dtype=jnp.float32)                       # zeros_ init
    v_stack = 0.1 * jax.random.normal(k_v, (H, A), dtype=jnp.float32)    # normal_(std=0.1)
    wo_t = jax.random.uniform(k_wo, (D, D), minval=-1.0 / np.sqrt(D),
                              maxval=1.0 / np.sqrt(D), dtype=jnp.float32)
    bo = jax.random.uniform(k_bo, (D,), minval=-1.0 / np.sqrt(D),
                            maxval=1.0 / np.sqrt(D), dtype=jnp.float32)

    # Parameter preprocessing hoisted out of the per-call path (done once).
    params = prepare_params(w_stack, b_stack, v_stack, wo_t, bo)

    out = multi_head_attention_pooling(x, mask, params)
    out = jax.block_until_ready(out)

    ref = reference(x, mask, w_stack, b_stack, v_stack, wo_t, bo)
    # Tolerance accounts for bf16 MXU operands (f32 accumulation) plus the EUP approx
    # reciprocal in the softmax denominator; reference is pure f32.
    np.testing.assert_allclose(np.asarray(out), np.asarray(ref), rtol=2e-2, atol=2e-2)

    print("KERNEL_OK")
</pallas_src>

<mosaic_0001>
module attributes {stable_mosaic.version = 11 : i64} {
  func.func @_mha_pool_kernel(%arg0: i32, %arg1: memref<1x8x32xbf16, #tpu.memory_space<vmem>>, %arg2: memref<1x8x8xf32, #tpu.memory_space<vmem>>, %arg3: memref<32x32xbf16, #tpu.memory_space<vmem>>, %arg4: memref<1x32xf32, #tpu.memory_space<vmem>>, %arg5: memref<32x8xbf16, #tpu.memory_space<vmem>>, %arg6: memref<8x32xbf16, #tpu.memory_space<vmem>>, %arg7: memref<32x32xbf16, #tpu.memory_space<vmem>>, %arg8: memref<1x32xf32, #tpu.memory_space<vmem>>, %arg9: memref<1x1x32xf32, #tpu.memory_space<vmem>>) attributes {dimension_semantics = [#tpu.dimension_semantics<parallel>], iteration_bounds = array<i64: 2>, scalar_prefetch = 0 : i64, scratch_operands = 0 : i64, tpu.core_type = #tpu.core_type<tc>, window_params = [{transform_indices = @transform_0, window_bounds = array<i64: 1, 8, 32>}, {transform_indices = @transform_1, window_bounds = array<i64: 1, 8, 8>}, {pipeline_mode = #tpu.pipeline_mode<synchronous>, transform_indices = @transform_2, window_bounds = array<i64: 32, 32>}, {pipeline_mode = #tpu.pipeline_mode<synchronous>, transform_indices = @transform_3, window_bounds = array<i64: 1, 32>}, {pipeline_mode = #tpu.pipeline_mode<synchronous>, transform_indices = @transform_4, window_bounds = array<i64: 32, 8>}, {pipeline_mode = #tpu.pipeline_mode<synchronous>, transform_indices = @transform_5, window_bounds = array<i64: 8, 32>}, {pipeline_mode = #tpu.pipeline_mode<synchronous>, transform_indices = @transform_6, window_bounds = array<i64: 32, 32>}, {pipeline_mode = #tpu.pipeline_mode<synchronous>, transform_indices = @transform_7, window_bounds = array<i64: 1, 32>}, {transform_indices = @transform_8, window_bounds = array<i64: 1, 1, 32>}]} {
    %c0 = arith.constant 0 : index
    %c0_0 = arith.constant 0 : index
    %c0_1 = arith.constant 0 : index
    %0 = vector.load %arg1[%c0, %c0_0, %c0_1] : memref<1x8x32xbf16, #tpu.memory_space<vmem>>, vector<1x8x32xbf16>
    %1 = vector.shape_cast %0 : vector<1x8x32xbf16> to vector<8x32xbf16>
    %2 = arith.extf %1 : vector<8x32xbf16> to vector<8x32xf32>
    %c0_2 = arith.constant 0 : index
    %c0_3 = arith.constant 0 : index
    %3 = vector.load %arg3[%c0_2, %c0_3] : memref<32x32xbf16, #tpu.memory_space<vmem>>, vector<32x32xbf16>
    %cst = arith.constant dense<0.000000e+00> : vector<8x32xf32>
    %4 = tpu.matmul %1, %3, %cst {dimension_numbers = #tpu.dot_dimension_numbers<[1], [0], [0], [1], [0, 0, 1, 1], [], []>} : vector<8x32xbf16>, vector<32x32xbf16>, vector<8x32xf32> -> vector<8x32xf32>
    %c0_4 = arith.constant 0 : index
    %c0_5 = arith.constant 0 : index
    %5 = vector.load %arg4[%c0_4, %c0_5] : memref<1x32xf32, #tpu.memory_space<vmem>>, vector<1x32xf32>
    %6 = vector.broadcast %5 : vector<1x32xf32> to vector<8x32xf32>
    %7 = arith.addf %4, %6 : vector<8x32xf32>
    %8 = math.tanh %7 : vector<8x32xf32>
    %9 = arith.truncf %8 : vector<8x32xf32> to vector<8x32xbf16>
    %c0_6 = arith.constant 0 : index
    %c0_7 = arith.constant 0 : index
    %10 = vector.load %arg5[%c0_6, %c0_7] : memref<32x8xbf16, #tpu.memory_space<vmem>>, vector<32x8xbf16>
    %cst_8 = arith.constant dense<0.000000e+00> : vector<8x8xf32>
    %11 = tpu.matmul %9, %10, %cst_8 {dimension_numbers = #tpu.dot_dimension_numbers<[1], [0], [0], [1], [0, 0, 1, 1], [], []>} : vector<8x32xbf16>, vector<32x8xbf16>, vector<8x8xf32> -> vector<8x8xf32>
    %c0_9 = arith.constant 0 : index
    %c0_10 = arith.constant 0 : index
    %c0_11 = arith.constant 0 : index
    %12 = vector.load %arg2[%c0_9, %c0_10, %c0_11] : memref<1x8x8xf32, #tpu.memory_space<vmem>>, vector<1x8x8xf32>
    %13 = vector.shape_cast %12 : vector<1x8x8xf32> to vector<8x8xf32>
    %14 = arith.addf %11, %13 : vector<8x8xf32>
    %cst_12 = arith.constant dense<0xFF800000> : vector<8xf32>
    %15 = vector.multi_reduction <maximumf>, %14, %cst_12 [0] : vector<8x8xf32> to vector<8xf32>
    %16 = vector.shape_cast %15 : vector<8xf32> to vector<1x8xf32>
    %17 = vector.broadcast %16 : vector<1x8xf32> to vector<8x8xf32>
    %18 = arith.subf %14, %17 : vector<8x8xf32>
    %19 = math.exp %18 : vector<8x8xf32>
    %cst_13 = arith.constant dense<0.000000e+00> : vector<8xf32>
    %20 = vector.multi_reduction <add>, %19, %cst_13 [0] : vector<8x8xf32> to vector<8xf32>
    %21 = vector.shape_cast %20 : vector<8xf32> to vector<1x8xf32>
    %22 = tpu.reciprocal %21 {approx = true} : vector<1x8xf32> -> vector<1x8xf32>
    %23 = vector.broadcast %22 : vector<1x8xf32> to vector<8x8xf32>
    %24 = arith.mulf %19, %23 : vector<8x8xf32>
    %25 = arith.truncf %24 : vector<8x8xf32> to vector<8x8xbf16>
    %c0_14 = arith.constant 0 : index
    %c0_15 = arith.constant 0 : index
    %26 = vector.load %arg6[%c0_14, %c0_15] : memref<8x32xbf16, #tpu.memory_space<vmem>>, vector<8x32xbf16>
    %cst_16 = arith.constant dense<0.000000e+00> : vector<8x32xf32>
    %27 = tpu.matmul %25, %26, %cst_16 {dimension_numbers = #tpu.dot_dimension_numbers<[1], [0], [0], [1], [0, 0, 1, 1], [], []>} : vector<8x8xbf16>, vector<8x32xbf16>, vector<8x32xf32> -> vector<8x32xf32>
    %28 = arith.mulf %27, %2 : vector<8x32xf32>
    %cst_17 = arith.constant dense<0.000000e+00> : vector<32xf32>
    %29 = vector.multi_reduction <add>, %28, %cst_17 [0] : vector<8x32xf32> to vector<32xf32>
    %30 = vector.shape_cast %29 : vector<32xf32> to vector<1x32xf32>
    %31 = arith.truncf %30 : vector<1x32xf32> to vector<1x32xbf16>
    %c0_18 = arith.constant 0 : index
    %c0_19 = arith.constant 0 : index
    %32 = vector.load %arg7[%c0_18, %c0_19] : memref<32x32xbf16, #tpu.memory_space<vmem>>, vector<32x32xbf16>
    %cst_20 = arith.constant dense<0.000000e+00> : vector<1x32xf32>
    %33 = tpu.matmul %31, %32, %cst_20 {dimension_numbers = #tpu.dot_dimension_numbers<[1], [0], [0], [1], [0, 0, 1, 1], [], []>} : vector<1x32xbf16>, vector<32x32xbf16>, vector<1x32xf32> -> vector<1x32xf32>
    %c0_21 = arith.constant 0 : index
    %c0_22 = arith.constant 0 : index
    %34 = vector.load %arg8[%c0_21, %c0_22] : memref<1x32xf32, #tpu.memory_space<vmem>>, vector<1x32xf32>
    %35 = arith.addf %33, %34 : vector<1x32xf32>
    %c0_23 = arith.constant 0 : index
    %c0_24 = arith.constant 0 : index
    %c0_25 = arith.constant 0 : index
    %36 = vector.load %arg9[%c0_23, %c0_24, %c0_25] : memref<1x1x32xf32, #tpu.memory_space<vmem>>, vector<1x1x32xf32>
    %37 = vector.shape_cast %36 : vector<1x1x32xf32> to vector<1x32xf32>
    %38 = vector.shape_cast %35 : vector<1x32xf32> to vector<1x1x32xf32>
    tpu.vector_store %arg9[%c0_23, %c0_24, %c0_25], %38 {strides = array<i32>} : memref<1x1x32xf32, #tpu.memory_space<vmem>>, vector<1x1x32xf32>,
    return
  }
  func.func @transform_0(%arg0: i32) -> (i32, i32, i32) {
    %c0_i32 = arith.constant 0 : i32
    %c0_i32_0 = arith.constant 0 : i32
    %c0_i32_1 = arith.constant 0 : i32
    return %arg0, %c0_i32, %c0_i32_0 : i32, i32, i32
  }
  func.func @transform_1(%arg0: i32) -> (i32, i32, i32) {
    %c0_i32 = arith.constant 0 : i32
    %c0_i32_0 = arith.constant 0 : i32
    %c0_i32_1 = arith.constant 0 : i32
    return %arg0, %c0_i32, %c0_i32_0 : i32, i32, i32
  }
  func.func @transform_2(%arg0: i32) -> (i32, i32) {
    %c0_i32 = arith.constant 0 : i32
    %c0_i32_0 = arith.constant 0 : i32
    %c0_i32_1 = arith.constant 0 : i32
    return %c0_i32, %c0_i32_0 : i32, i32
  }
  func.func @transform_3(%arg0: i32) -> (i32, i32) {
    %c0_i32 = arith.constant 0 : i32
    %c0_i32_0 = arith.constant 0 : i32
    %c0_i32_1 = arith.constant 0 : i32
    return %c0_i32, %c0_i32_0 : i32, i32
  }
  func.func @transform_4(%arg0: i32) -> (i32, i32) {
    %c0_i32 = arith.constant 0 : i32
    %c0_i32_0 = arith.constant 0 : i32
    %c0_i32_1 = arith.constant 0 : i32
    return %c0_i32, %c0_i32_0 : i32, i32
  }
  func.func @transform_5(%arg0: i32) -> (i32, i32) {
    %c0_i32 = arith.constant 0 : i32
    %c0_i32_0 = arith.constant 0 : i32
    %c0_i32_1 = arith.constant 0 : i32
    return %c0_i32, %c0_i32_0 : i32, i32
  }
  func.func @transform_6(%arg0: i32) -> (i32, i32) {
    %c0_i32 = arith.constant 0 : i32
    %c0_i32_0 = arith.constant 0 : i32
    %c0_i32_1 = arith.constant 0 : i32
    return %c0_i32, %c0_i32_0 : i32, i32
  }
  func.func @transform_7(%arg0: i32) -> (i32, i32) {
    %c0_i32 = arith.constant 0 : i32
    %c0_i32_0 = arith.constant 0 : i32
    %c0_i32_1 = arith.constant 0 : i32
    return %c0_i32, %c0_i32_0 : i32, i32
  }
  func.func @transform_8(%arg0: i32) -> (i32, i32, i32) {
    %c0_i32 = arith.constant 0 : i32
    %c0_i32_0 = arith.constant 0 : i32
    %c0_i32_1 = arith.constant 0 : i32
    return %arg0, %c0_i32, %c0_i32_0 : i32, i32, i32
  }
}

</mosaic_0001>

<llo_original>
// kernel: tpu_custom_call.1
$region0: #{tpu_custom_call.1}
  #allocation0 [shape = 'u32[]', space=smem, size = 0x4, offset = 0x4, fixed_abs, tag = 'smem constant byte address 0x4 - core index']
  #allocation1 [shape = 'u32[144,128]{1,0:T(1,128)}', space=vmem, size = 0x12000, scoped, tag = 'internal scratch']
  %s0 = inlined_call_operand.hbm [shape: bf16[2,8,32], index: 0, kind: input, shape index: {}]
  %s1 = inlined_call_operand.vmem [shape: f32[2,8,8], index: 1, kind: input, shape index: {}]
  %s2 = inlined_call_operand.hbm [shape: bf16[32,32], index: 2, kind: input, shape index: {}]
  %s3 = inlined_call_operand.vmem [shape: f32[1,32], index: 3, kind: input, shape index: {}]
  %s4 = inlined_call_operand.vmem [shape: bf16[32,8], index: 4, kind: input, shape index: {}]
  %s5 = inlined_call_operand.vmem [shape: bf16[8,32], index: 5, kind: input, shape index: {}]
  %s6 = inlined_call_operand.vmem [shape: bf16[32,32], index: 6, kind: input, shape index: {}]
  %s7 = inlined_call_operand.vmem [shape: f32[1,32], index: 7, kind: input, shape index: {}]
  %s8 = inlined_call_operand.hbm [shape: f32[2,1,32], index: 8, kind: output, shape index: {}]
  %s9 = sld [smem:[#allocation0]]
  $region73: #{tpu_custom_call.1} parent=0
    _
  %s11 = ssub.s32 1, %s9
  %s12 = scalar_select 0, %s11, %s9
  $region1: #{tpu_custom_call.1} parent=0
    #allocation2 [shape = 'u8[4096]{0}', space=vmem, size = 0x1000, scoped, tag = 'input window, operand 0']
    #allocation3 [shape = 's32[2]{0}', space=sflag, size = 0x8, scoped, tag = 'scoped memory for tpu_custom_call.1']
    #allocation4 [shape = 's32[2]{0}', space=sflag, size = 0x8, scoped, tag = 'scoped memory for tpu_custom_call.1']
    #allocation5 [shape = 'u8[8192]{0}', space=vmem, size = 0x2000, scoped, tag = 'input window, operand 2, single buffered']
    #allocation6 [shape = 's32[1]{0}', space=sflag, size = 0x4, scoped, tag = 'scoped memory for tpu_custom_call.1']
    #allocation7 [shape = 'u8[1024]{0}', space=vmem, size = 0x400, scoped, tag = 'output window, operand 0']
    %13 = vsyncpa [#allocation3], 0
    %s14 = scalar_lea.sflag [#allocation3], 1
    %15 = vsyncpa %s14, 0
    %16 = vsyncpa [#allocation6], 0
    %17 = vsyncpa [#allocation4], 0
    %s18 = scalar_lea.sflag [#allocation4], 1
    %19 = vsyncpa %s18, 0
    loop: start=0, step=1, limit=4
    $region2: #{tpu_custom_call.1} parent=1 // loop_pre_header
      _
    $region3: #{tpu_custom_call.1} parent=1 // loop_header
      %s21 = sphi 0, %s25
      %p22 = scmp.ge.s32.totalorder %s21, 4
      %s31 = sphi 0, %s33
      %s34 = sphi 0, %s31
      %s35 = sphi 0, %s34
      %s51 = sphi 0, %s35
      %s57 = sphi 0, %s59
      %s60 = sphi 0, %s57
      %s61 = sphi 0, %s60
      %s77 = sphi 0, %s61
      %s81 = sphi 0, %s81
      %s83 = sphi 0, %s81
      %s84 = sphi 0, %s83
      %s98 = sphi 0, %s84
      %s102 = sphi 0, %s102
      %s104 = sphi 0, %s102
      %s105 = sphi 0, %s104
      %s119 = sphi 0, %s105
      %s123 = sphi 0, %s123
      %s125 = sphi 0, %s123
      %s126 = sphi 0, %s125
      %s140 = sphi 0, %s126
      %s144 = sphi 0, %s144
      %s146 = sphi 0, %s144
      %s147 = sphi 0, %s146
      %s161 = sphi 0, %s147
      %s165 = sphi 0, %s165
      %s167 = sphi 0, %s165
      %s168 = sphi 0, %s167
      %s182 = sphi 0, %s168
      %s186 = sphi 0, %s186
      %s188 = sphi 0, %s186
      %s189 = sphi 0, %s188
      %s203 = sphi 0, %s189
      %s209 = sphi 0, %s211
      %s212 = sphi 0, %s209
      %s213 = sphi 0, %s212
      %s229 = sphi 0, %s213
    $region4: #{tpu_custom_call.1} parent=1 // loop_header_branch
      %24 = sbr.rel (%p22) target = $region8
    $region5: #{tpu_custom_call.1} parent=1 // loop_body
      %s26 = ssub.s32 %s21, 1
      %s27 = ssub.s32 %s21, 2
      %s28 = sadd.s32 %s21, 1
      %s29 = ssub.s32 %s21, %s28
      %p30 = scmp.eq.s32.totalorder %s29, 0
      %s32 = sadd.s32 %s31, 1
      %s33 = scalar_select %p30, %s31, %s32
      %p36 = pneg %p30
      %p37 = scmp.eq.s32.totalorder %s21, 1
      %p38 = por %p36, %p37
      %p39 = scmp.ne.s32.totalorder %s31, %s34
      %p40 = scmp.eq.s32.totalorder %s21, 0
      %p41 = por %p39, %p40
      %p42 = scmp.ne.s32.totalorder %s31, %s34
      %p43 = scmp.eq.s32.totalorder %s26, 1
      %p44 = por %p42, %p43
      %p45 = scmp.ne.s32.totalorder %s34, %s35
      %p46 = scmp.eq.s32.totalorder %s26, 0
      %p47 = por %p45, %p46
      %p48 = scmp.ne.s32.totalorder %s34, %s35
      %p49 = scmp.eq.s32.totalorder %s27, 1
      %p50 = por %p48, %p49
      %p52 = scmp.ne.s32.totalorder %s35, %s51
      %p53 = scmp.eq.s32.totalorder %s27, 0
      %p54 = por %p52, %p53
      %s55 = ssub.s32 %s21, %s28
      %p56 = scmp.eq.s32.totalorder %s55, 0
      %s58 = sadd.s32 %s57, 1
      %s59 = scalar_select %p56, %s57, %s58
      %p62 = pneg %p56
      %p63 = scmp.eq.s32.totalorder %s21, 1
      %p64 = por %p62, %p63
      %p65 = scmp.ne.s32.totalorder %s57, %s60
      %p66 = scmp.eq.s32.totalorder %s21, 0
      %p67 = por %p65, %p66
      %p68 = scmp.ne.s32.totalorder %s57, %s60
      %p69 = scmp.eq.s32.totalorder %s26, 1
      %p70 = por %p68, %p69
      %p71 = scmp.ne.s32.totalorder %s60, %s61
      %p72 = scmp.eq.s32.totalorder %s26, 0
      %p73 = por %p71, %p72
      %p74 = scmp.ne.s32.totalorder %s60, %s61
      %p75 = scmp.eq.s32.totalorder %s27, 1
      %p76 = por %p74, %p75
      %p78 = scmp.ne.s32.totalorder %s61, %s77
      %p79 = scmp.eq.s32.totalorder %s27, 0
      %p80 = por %p78, %p79
      %s82 = sadd.s32 %s81, 1
      %p85 = scmp.eq.s32.totalorder %s21, 1
      %p86 = scmp.ne.s32.totalorder %s81, %s83
      %p87 = scmp.eq.s32.totalorder %s21, 0
      %p88 = por %p86, %p87
      %p89 = scmp.ne.s32.totalorder %s81, %s83
      %p90 = scmp.eq.s32.totalorder %s26, 1
      %p91 = por %p89, %p90
      %p92 = scmp.ne.s32.totalorder %s83, %s84
      %p93 = scmp.eq.s32.totalorder %s26, 0
      %p94 = por %p92, %p93
      %p95 = scmp.ne.s32.totalorder %s83, %s84
      %p96 = scmp.eq.s32.totalorder %s27, 1
      %p97 = por %p95, %p96
      %p99 = scmp.ne.s32.totalorder %s84, %s98
      %p100 = scmp.eq.s32.totalorder %s27, 0
      %p101 = por %p99, %p100
      %s103 = sadd.s32 %s102, 1
      %p106 = scmp.eq.s32.totalorder %s21, 1
      %p107 = scmp.ne.s32.totalorder %s102, %s104
      %p108 = scmp.eq.s32.totalorder %s21, 0
      %p109 = por %p107, %p108
      %p110 = scmp.ne.s32.totalorder %s102, %s104
      %p111 = scmp.eq.s32.totalorder %s26, 1
      %p112 = por %p110, %p111
      %p113 = scmp.ne.s32.totalorder %s104, %s105
      %p114 = scmp.eq.s32.totalorder %s26, 0
      %p115 = por %p113, %p114
      %p116 = scmp.ne.s32.totalorder %s104, %s105
      %p117 = scmp.eq.s32.totalorder %s27, 1
      %p118 = por %p116, %p117
      %p120 = scmp.ne.s32.totalorder %s105, %s119
      %p121 = scmp.eq.s32.totalorder %s27, 0
      %p122 = por %p120, %p121
      %s124 = sadd.s32 %s123, 1
      %p127 = scmp.eq.s32.totalorder %s21, 1
      %p128 = scmp.ne.s32.totalorder %s123, %s125
      %p129 = scmp.eq.s32.totalorder %s21, 0
      %p130 = por %p128, %p129
      %p131 = scmp.ne.s32.totalorder %s123, %s125
      %p132 = scmp.eq.s32.totalorder %s26, 1
      %p133 = por %p131, %p132
      %p134 = scmp.ne.s32.totalorder %s125, %s126
      %p135 = scmp.eq.s32.totalorder %s26, 0
      %p136 = por %p134, %p135
      %p137 = scmp.ne.s32.totalorder %s125, %s126
      %p138 = scmp.eq.s32.totalorder %s27, 1
      %p139 = por %p137, %p138
      %p141 = scmp.ne.s32.totalorder %s126, %s140
      %p142 = scmp.eq.s32.totalorder %s27, 0
      %p143 = por %p141, %p142
      %s145 = sadd.s32 %s144, 1
      %p148 = scmp.eq.s32.totalorder %s21, 1
      %p149 = scmp.ne.s32.totalorder %s144, %s146
      %p150 = scmp.eq.s32.totalorder %s21, 0
      %p151 = por %p149, %p150
      %p152 = scmp.ne.s32.totalorder %s144, %s146
      %p153 = scmp.eq.s32.totalorder %s26, 1
      %p154 = por %p152, %p153
      %p155 = scmp.ne.s32.totalorder %s146, %s147
      %p156 = scmp.eq.s32.totalorder %s26, 0
      %p157 = por %p155, %p156
      %p158 = scmp.ne.s32.totalorder %s146, %s147
      %p159 = scmp.eq.s32.totalorder %s27, 1
      %p160 = por %p158, %p159
      %p162 = scmp.ne.s32.totalorder %s147, %s161
      %p163 = scmp.eq.s32.totalorder %s27, 0
      %p164 = por %p162, %p163
      %s166 = sadd.s32 %s165, 1
      %p169 = scmp.eq.s32.totalorder %s21, 1
      %p170 = scmp.ne.s32.totalorder %s165, %s167
      %p171 = scmp.eq.s32.totalorder %s21, 0
      %p172 = por %p170, %p171
      %p173 = scmp.ne.s32.totalorder %s165, %s167
      %p174 = scmp.eq.s32.totalorder %s26, 1
      %p175 = por %p173, %p174
      %p176 = scmp.ne.s32.totalorder %s167, %s168
      %p177 = scmp.eq.s32.totalorder %s26, 0
      %p178 = por %p176, %p177
      %p179 = scmp.ne.s32.totalorder %s167, %s168
      %p180 = scmp.eq.s32.totalorder %s27, 1
      %p181 = por %p179, %p180
      %p183 = scmp.ne.s32.totalorder %s168, %s182
      %p184 = scmp.eq.s32.totalorder %s27, 0
      %p185 = por %p183, %p184
      %s187 = sadd.s32 %s186, 1
      %p190 = scmp.eq.s32.totalorder %s21, 1
      %p191 = scmp.ne.s32.totalorder %s186, %s188
      %p192 = scmp.eq.s32.totalorder %s21, 0
      %p193 = por %p191, %p192
      %p194 = scmp.ne.s32.totalorder %s186, %s188
      %p195 = scmp.eq.s32.totalorder %s26, 1
      %p196 = por %p194, %p195
      %p197 = scmp.ne.s32.totalorder %s188, %s189
      %p198 = scmp.eq.s32.totalorder %s26, 0
      %p199 = por %p197, %p198
      %p200 = scmp.ne.s32.totalorder %s188, %s189
      %p201 = scmp.eq.s32.totalorder %s27, 1
      %p202 = por %p200, %p201
      %p204 = scmp.ne.s32.totalorder %s189, %s203
      %p205 = scmp.eq.s32.totalorder %s27, 0
      %p206 = por %p204, %p205
      %s207 = ssub.s32 %s21, %s28
      %p208 = scmp.eq.s32.totalorder %s207, 0
      %s210 = sadd.s32 %s209, 1
      %s211 = scalar_select %p208, %s209, %s210
      %p214 = pneg %p208
      %p215 = scmp.eq.s32.totalorder %s21, 1
      %p216 = por %p214, %p215
      %p217 = scmp.ne.s32.totalorder %s209, %s212
      %p218 = scmp.eq.s32.totalorder %s21, 0
      %p219 = por %p217, %p218
      %p220 = scmp.ne.s32.totalorder %s209, %s212
      %p221 = scmp.eq.s32.totalorder %s26, 1
      %p222 = por %p220, %p221
      %p223 = scmp.ne.s32.totalorder %s212, %s213
      %p224 = scmp.eq.s32.totalorder %s26, 0
      %p225 = por %p223, %p224
      %p226 = scmp.ne.s32.totalorder %s212, %s213
      %p227 = scmp.eq.s32.totalorder %s27, 1
      %p228 = por %p226, %p227
      %p230 = scmp.ne.s32.totalorder %s213, %s229
      %p231 = scmp.eq.s32.totalorder %s27, 0
      %p232 = por %p230, %p231
      %p233 = scmp.le.s32.totalorder 1, %s21
      %p234 = scmp.lt.s32.totalorder %s21, 3
      %p235 = pnand %p233, %p234
      %p236 = pneg %p235
      // Predicated region
      $region9: #{tpu_custom_call.1} parent=5 // pred_check
        _
      $region10: #{tpu_custom_call.1} parent=5 // pred_check_branch
        %238 = sbr.rel (%p235) target = $region12
      $region11: #{tpu_custom_call.1} parent=5 // pred_region
        %s239 = ssub.s32 %s21, 1
        // Predicated region
        $region13: #{tpu_custom_call.1} parent=11 // pred_check
          %p240 = pneg %p94
        $region14: #{tpu_custom_call.1} parent=11 // pred_check_branch
          %242 = sbr.rel (%p240) target = $region16
        $region15: #{tpu_custom_call.1} parent=11 // pred_region
          %s244 = ssub.s32 256, 256
          %245 = vsyncadd [#allocation6], %s244
          %s246 = sshll.u32 [#allocation5], 4
          %s247 = int_to_ptr.vmem [resolvable:$true] %s246
          %252 = dma.hbm_to_vmem [thread:$0]  %s2, 256, %s247, [#allocation6], 64, 64, 4
        $region16: #{tpu_custom_call.1} parent=11 // pred_fallthru
          _
        // Predicated region
        $region17: #{tpu_custom_call.1} parent=11 // pred_check
          %p253 = pneg %p115
        $region18: #{tpu_custom_call.1} parent=11 // pred_check_branch
          %255 = sbr.rel (%p253) target = $region20
        $region19: #{tpu_custom_call.1} parent=11 // pred_region
          _
        $region20: #{tpu_custom_call.1} parent=11 // pred_fallthru
          _
        // Predicated region
        $region21: #{tpu_custom_call.1} parent=11 // pred_check
          %p256 = pneg %p136
        $region22: #{tpu_custom_call.1} parent=11 // pred_check_branch
          %258 = sbr.rel (%p256) target = $region24
        $region23: #{tpu_custom_call.1} parent=11 // pred_region
          _
        $region24: #{tpu_custom_call.1} parent=11 // pred_fallthru
          _
        // Predicated region
        $region25: #{tpu_custom_call.1} parent=11 // pred_check
          %p259 = pneg %p157
        $region26: #{tpu_custom_call.1} parent=11 // pred_check_branch
          %261 = sbr.rel (%p259) target = $region28
        $region27: #{tpu_custom_call.1} parent=11 // pred_region
          _
        $region28: #{tpu_custom_call.1} parent=11 // pred_fallthru
          _
        // Predicated region
        $region29: #{tpu_custom_call.1} parent=11 // pred_check
          %p262 = pneg %p178
        $region30: #{tpu_custom_call.1} parent=11 // pred_check_branch
          %264 = sbr.rel (%p262) target = $region32
        $region31: #{tpu_custom_call.1} parent=11 // pred_region
          _
        $region32: #{tpu_custom_call.1} parent=11 // pred_fallthru
          _
        // Predicated region
        $region33: #{tpu_custom_call.1} parent=11 // pred_check
          %p265 = pneg %p199
        $region34: #{tpu_custom_call.1} parent=11 // pred_check_branch
          %267 = sbr.rel (%p265) target = $region36
        $region35: #{tpu_custom_call.1} parent=11 // pred_region
          _
        $region36: #{tpu_custom_call.1} parent=11 // pred_fallthru
          _
      $region12: #{tpu_custom_call.1} parent=5 // pred_fallthru
        _
      %p268 = scmp.lt.s32.totalorder %s21, 2
      // Predicated region
      $region37: #{tpu_custom_call.1} parent=5 // pred_check
        %p269 = pneg %p268
      $region38: #{tpu_custom_call.1} parent=5 // pred_check_branch
        %271 = sbr.rel (%p269) target = $region40
      $region39: #{tpu_custom_call.1} parent=5 // pred_region
        // Predicated region
        $region41: #{tpu_custom_call.1} parent=39 // pred_check
          %p272 = pneg %p41
        $region42: #{tpu_custom_call.1} parent=39 // pred_check_branch
          %274 = sbr.rel (%p272) target = $region44
        $region43: #{tpu_custom_call.1} parent=39 // pred_region
          %s275 = sand.u32 %s31, 1
          %s276 = scalar_lea.sflag [#allocation3], %s275
          %s277 = sand.u32 %s31, 1
          %s278 = smul.addr %s277, 4
          %s279 = scalar_lea.vmem [#allocation2], %s278
          %s281 = ssub.s32 64, 64
          %282 = vsyncadd %s276, %s281
          %s283 = smul.addr %s21, 64
          %s284 = scalar_lea.hbm %s0, %s283
          %s286 = sshll.u32 %s279, 4
          %s287 = int_to_ptr.vmem [resolvable:$true] %s286
          %289 = dma.hbm_to_vmem [thread:$0]  %s284, 64, %s287, %s276
        $region44: #{tpu_custom_call.1} parent=39 // pred_fallthru
          _
        // Predicated region
        $region45: #{tpu_custom_call.1} parent=39 // pred_check
          %p290 = pneg %p67
        $region46: #{tpu_custom_call.1} parent=39 // pred_check_branch
          %292 = sbr.rel (%p290) target = $region48
        $region47: #{tpu_custom_call.1} parent=39 // pred_region
          %p293 = scmp.lt.s32.totalorder %s21, 1
          %s294 = scalar_select %p293, %s21, 1
          %s295 = smul.addr %s294, 8
          %s296 = scalar_lea.vmem %s1, %s295
        $region48: #{tpu_custom_call.1} parent=39 // pred_fallthru
          _
      $region40: #{tpu_custom_call.1} parent=5 // pred_fallthru
        _
      %p297 = scmp.le.s32.totalorder 1, %s21
      %p298 = scmp.lt.s32.totalorder %s21, 3
      %p299 = pnand %p297, %p298
      %p300 = pneg %p299
      // Predicated region
      $region49: #{tpu_custom_call.1} parent=5 // pred_check
        _
      $region50: #{tpu_custom_call.1} parent=5 // pred_check_branch
        %302 = sbr.rel (%p299) target = $region52
      $region51: #{tpu_custom_call.1} parent=5 // pred_region
        %s303 = ssub.s32 %s21, 1
        %s304 = sand.u32 %s34, 1
        %s305 = scalar_lea.sflag [#allocation3], %s304
        %s306 = sand.u32 %s34, 1
        %s307 = smul.addr %s306, 4
        %s308 = scalar_lea.vmem [#allocation2], %s307
        // Predicated region
        $region53: #{tpu_custom_call.1} parent=51 // pred_check
          %p309 = pneg %p47
        $region54: #{tpu_custom_call.1} parent=51 // pred_check_branch
          %311 = sbr.rel (%p309) target = $region56
        $region55: #{tpu_custom_call.1} parent=51 // pred_region
          %312 = dma.done %s305, 64
        $region56: #{tpu_custom_call.1} parent=51 // pred_fallthru
          _
        // Predicated region
        $region57: #{tpu_custom_call.1} parent=51 // pred_check
          %p313 = pneg %p94
        $region58: #{tpu_custom_call.1} parent=51 // pred_check_branch
          %315 = sbr.rel (%p313) target = $region60
        $region59: #{tpu_custom_call.1} parent=51 // pred_region
          %316 = dma.done [#allocation6], 256
        $region60: #{tpu_custom_call.1} parent=51 // pred_fallthru
          _
        %s317 = sand.u32 %s34, 1
        %s318 = scalar_lea.sflag [#allocation3], %s317
        %s319 = sand.u32 %s34, 1
        %s320 = smul.addr %s319, 4
        %s321 = scalar_lea.vmem [#allocation2], %s320
        %p322 = pneg %p47
        %p323 = pneg %p44
        %p324 = scmp.lt.s32.totalorder %s26, 1
        %s325 = scalar_select %p324, %s26, 1
        %s326 = smul.addr %s325, 8
        %s327 = scalar_lea.vmem %s1, %s326
        %p328 = pneg %p73
        %p329 = pneg %p70
        %p330 = pneg %p94
        %p331 = pneg %p91
        %p332 = pneg %p115
        %p333 = pneg %p112
        %p334 = pneg %p136
        %p335 = pneg %p133
        %p336 = pneg %p157
        %p337 = pneg %p154
        %p338 = pneg %p178
        %p339 = pneg %p175
        %p340 = pneg %p199
        %p341 = pneg %p196
        %p342 = pneg %p225
        %p343 = pneg %p222
        %s344 = sand.u32 %s212, 1
        %s345 = scalar_lea.sflag [#allocation4], %s344
        %s346 = sand.u32 %s212, 1
        %s347 = scalar_lea.vmem [#allocation7], %s346
        %p348 = scmp.lt.s32.totalorder %s26, 1
        %s349 = scalar_select %p348, %s26, 1
        %s350 = smul.addr %s349, 8
        %s351 = scalar_lea.vmem %s1, %s350
        %v353 = vld [vmem:[%s308] sm:$0xf]
        %v354 = vunpack.c.l.bf16 %v353
        %v355 = vld [vmem:[#allocation5] sm:$0xf]
        %v356 = vld [vmem:[#allocation5 + $0x4] sm:$0xf]
        %v357 = vld [vmem:[#allocation5 + $0x8] sm:$0xf]
        %v358 = vld [vmem:[#allocation5 + $0xc] sm:$0xf]
        %v359 = vld [vmem:[%s3] sm:$0x1]
        %v361 = vlaneseq
        %v362 = vshrl.u32 %v361, 7
        %v363 = vsub.s32 0, %v362
        %v364 = vrot.slane %v359, %v363
        %v370 = vunpack.c.l.b16 %v355
        %v371 = vunpack.c.l.b16 %v356
        %v372 = vunpack.c.l.b16 %v357
        %v373 = vunpack.c.l.b16 %v358
        %v374 = vpack.c.b16 %v371, %v370
        %v375 = vpack.c.b16 %v373, %v372
        %vm378 = vcmask 261120
        %v380 = vsel %vm378, %v353, 0
        %382 = vmatprep.subr.bf16.mxu0 0
        %383 = vmatpush1.bf16.msra.mxu0 %v374
        %384 = vmatprep.subr.bf16.mxu0 0
        %385 = vmatpush1.bf16.msra.mxu0 %v375
        %386 = vmatprep.subr.bf16.mxu0 0
        %387 = vmatpush1.bf16.msra.mxu0 0
        %388 = vmatprep.subr.bf16.mxu0 0
        %389 = vmatpush1.bf16.msra.mxu0 0
        %390 = vmatprep.subr.bf16.mxu0 0
        %391 = vmatpush1.bf16.msra.mxu0 0
        %392 = vmatprep.subr.bf16.mxu0 0
        %393 = vmatpush1.bf16.msra.mxu0 0
        %394 = vmatprep.subr.bf16.mxu0 0
        %395 = vmatpush1.bf16.msra.mxu0 0
        %396 = vmatprep.subr.bf16.mxu0 0
        %397 = vmatpush1.bf16.msra.mxu0 0
        %398 = vmatprep.subr.bf16.mxu0 0
        %399 = vmatpush1.bf16.msra.mxu0 0
        %400 = vmatprep.subr.bf16.mxu0 0
        %401 = vmatpush1.bf16.msra.mxu0 0
        %402 = vmatprep.subr.bf16.mxu0 0
        %403 = vmatpush1.bf16.msra.mxu0 0
        %404 = vmatprep.subr.bf16.mxu0 0
        %405 = vmatpush1.bf16.msra.mxu0 0
        %406 = vmatprep.subr.bf16.mxu0 0
        %407 = vmatpush1.bf16.msra.mxu0 0
        %408 = vmatprep.subr.bf16.mxu0 0
        %409 = vmatpush1.bf16.msra.mxu0 0
        %410 = vmatprep.subr.bf16.mxu0 0
        %411 = vmatpush1.bf16.msra.mxu0 0
        %412 = vmatprep.subr.bf16.mxu0 0
        %413 = vmatpush1.bf16.msra.mxu0 0
        %414 = vmatprep.mubr.bf16.mxu0 0
        %415 = vmatmul.mubr.bf16.gmra.mrb[0].mxu0 %v380
        %v416 = vpop.f32.mrb[0].mxu0
        %v417 = vadd.f32 %v364, %v416
        %v418 = vpop.f32.mrb[0].mxu0
        %v419 = vpop.f32.mrb[0].mxu0
        %v420 = vpop.f32.mrb[0].mxu0
        %421 = vdwg.mxu0
        %v422 = vtanh.pop %v417
        %v423 = vpack.c.bf16 %v422, %v422
        %v424 = vld [vmem:[%s4] sm:$0xf]
        %v425 = vld [vmem:[%s4 + $0x4] sm:$0xf]
        %v426 = vld [vmem:[%s4 + $0x8] sm:$0xf]
        %v427 = vld [vmem:[%s4 + $0xc] sm:$0xf]
        %v428 = vld [vmem:[%s351] sm:$0xff]
        %v433 = vunpack.c.l.b16 %v424
        %v434 = vunpack.c.l.b16 %v425
        %v435 = vunpack.c.l.b16 %v426
        %v436 = vunpack.c.l.b16 %v427
        %v437 = vpack.c.b16 %v434, %v433
        %v438 = vpack.c.b16 %v436, %v435
        %v442 = vsel %vm378, %v423, 0
        %444 = vmatprep.subr.bf16.mxu0 0
        %445 = vmatpush1.bf16.msra.mxu0 %v437
        %446 = vmatprep.subr.bf16.mxu0 0
        %447 = vmatpush1.bf16.msra.mxu0 %v438
        %448 = vmatprep.subr.bf16.mxu0 0
        %449 = vmatpush1.bf16.msra.mxu0 0
        %450 = vmatprep.subr.bf16.mxu0 0
        %451 = vmatpush1.bf16.msra.mxu0 0
        %452 = vmatprep.subr.bf16.mxu0 0
        %453 = vmatpush1.bf16.msra.mxu0 0
        %454 = vmatprep.subr.bf16.mxu0 0
        %455 = vmatpush1.bf16.msra.mxu0 0
        %456 = vmatprep.subr.bf16.mxu0 0
        %457 = vmatpush1.bf16.msra.mxu0 0
        %458 = vmatprep.subr.bf16.mxu0 0
        %459 = vmatpush1.bf16.msra.mxu0 0
        %460 = vmatprep.subr.bf16.mxu0 0
        %461 = vmatpush1.bf16.msra.mxu0 0
        %462 = vmatprep.subr.bf16.mxu0 0
        %463 = vmatpush1.bf16.msra.mxu0 0
        %464 = vmatprep.subr.bf16.mxu0 0
        %465 = vmatpush1.bf16.msra.mxu0 0
        %466 = vmatprep.subr.bf16.mxu0 0
        %467 = vmatpush1.bf16.msra.mxu0 0
        %468 = vmatprep.subr.bf16.mxu0 0
        %469 = vmatpush1.bf16.msra.mxu0 0
        %470 = vmatprep.subr.bf16.mxu0 0
        %471 = vmatpush1.bf16.msra.mxu0 0
        %472 = vmatprep.subr.bf16.mxu0 0
        %473 = vmatpush1.bf16.msra.mxu0 0
        %474 = vmatprep.subr.bf16.mxu0 0
        %475 = vmatpush1.bf16.msra.mxu0 0
        %476 = vmatprep.mubr.bf16.mxu0 0
        %477 = vmatmul.mubr.bf16.gmra.mrb[0].mxu0 %v442
        %v478 = vpop.f32.mrb[0].mxu0
        %v479 = vadd.f32 %v428, %v478
        %v480 = vpop.f32.mrb[0].mxu0
        %v481 = vpop.f32.mrb[0].mxu0
        %v482 = vpop.f32.mrb[0].mxu0
        %483 = vdwg.mxu0
        %vm484 = vcmask 64512
        %v485 = vsel %vm484, %v479, -inf
        %v486 = vrot.slane %v485, 4
        %v487 = vmax.f32 %v485, %v486
        %v488 = vrot.slane %v487, 2
        %v489 = vmax.f32 %v487, %v488
        %v490 = vrot.slane %v489, 1
        %v491 = vmax.f32 %v489, %v490
        %v492 = vsub.f32 %v479, %v491
        %v493 = vmul.f32 %v492, 1.442695
        %v494 = vpow.pop %v493
        %v495 = vsel %vm484, %v494, 0.0
        %v496 = vrot.slane %v495, 4
        %v497 = vadd.f32 %v495, %v496
        %v498 = vrot.slane %v497, 2
        %v499 = vadd.f32 %v497, %v498
        %v500 = vrot.slane %v499, 1
        %v501 = vadd.f32 %v499, %v500
        %v502 = vrcp.pop %v501
        %v503 = vmul.f32 %v494, %v502
        %v504 = vpack.c.bf16 %v503, %v503
        %v505 = vld [vmem:[%s5] sm:$0xf]
        %v507 = vsel %vm484, %v504, 0
        %vm509 = vcmask 1043456
        %v511 = vsel %vm509, %v505, 0
        %513 = vmatprep.subr.bf16.mxu0 0
        %514 = vmatpush1.bf16.msra.mxu0 %v511
        %515 = vmatprep.subr.bf16.mxu0 0
        %516 = vmatpush1.bf16.msra.mxu0 0
        %517 = vmatprep.subr.bf16.mxu0 0
        %518 = vmatpush1.bf16.msra.mxu0 0
        %519 = vmatprep.subr.bf16.mxu0 0
        %520 = vmatpush1.bf16.msra.mxu0 0
        %521 = vmatprep.subr.bf16.mxu0 0
        %522 = vmatpush1.bf16.msra.mxu0 0
        %523 = vmatprep.subr.bf16.mxu0 0
        %524 = vmatpush1.bf16.msra.mxu0 0
        %525 = vmatprep.subr.bf16.mxu0 0
        %526 = vmatpush1.bf16.msra.mxu0 0
        %527 = vmatprep.subr.bf16.mxu0 0
        %528 = vmatpush1.bf16.msra.mxu0 0
        %529 = vmatprep.subr.bf16.mxu0 0
        %530 = vmatpush1.bf16.msra.mxu0 0
        %531 = vmatprep.subr.bf16.mxu0 0
        %532 = vmatpush1.bf16.msra.mxu0 0
        %533 = vmatprep.subr.bf16.mxu0 0
        %534 = vmatpush1.bf16.msra.mxu0 0
        %535 = vmatprep.subr.bf16.mxu0 0
        %536 = vmatpush1.bf16.msra.mxu0 0
        %537 = vmatprep.subr.bf16.mxu0 0
        %538 = vmatpush1.bf16.msra.mxu0 0
        %539 = vmatprep.subr.bf16.mxu0 0
        %540 = vmatpush1.bf16.msra.mxu0 0
        %541 = vmatprep.subr.bf16.mxu0 0
        %542 = vmatpush1.bf16.msra.mxu0 0
        %543 = vmatprep.subr.bf16.mxu0 0
        %544 = vmatpush1.bf16.msra.mxu0 0
        %545 = vmatprep.mubr.bf16.mxu0 0
        %546 = vmatmul.mubr.bf16.gmra.mrb[0].mxu0 %v507
        %v547 = vpop.f32.mrb[0].mxu0
        %v548 = vadd.f32 0.0, %v547
        %v549 = vpop.f32.mrb[0].mxu0
        %v550 = vpop.f32.mrb[0].mxu0
        %v551 = vpop.f32.mrb[0].mxu0
        %552 = vdwg.mxu0
        %v553 = vmul.f32 %v548, %v354
        %v554 = vsel %vm378, %v553, 0.0
        %v555 = vrot.slane %v554, 4
        %v556 = vadd.f32 %v554, %v555
        %v557 = vrot.slane %v556, 2
        %v558 = vadd.f32 %v556, %v557
        %v559 = vrot.slane %v558, 1
        %v560 = vadd.f32 %v558, %v559
        %v561 = vpack.c.bf16 %v560, %v560
        %v562 = vld [vmem:[%s6] sm:$0xf]
        %v563 = vld [vmem:[%s6 + $0x4] sm:$0xf]
        %v564 = vld [vmem:[%s6 + $0x8] sm:$0xf]
        %v565 = vld [vmem:[%s6 + $0xc] sm:$0xf]
        %v566 = vld [vmem:[%s7] sm:$0x1]
        %v571 = vunpack.c.l.b16 %v562
        %v572 = vunpack.c.l.b16 %v563
        %v573 = vunpack.c.l.b16 %v564
        %v574 = vunpack.c.l.b16 %v565
        %v575 = vpack.c.b16 %v572, %v571
        %v576 = vpack.c.b16 %v574, %v573
        %v580 = vsel %vm378, %v561, 0
        %582 = vmatprep.subr.bf16.mxu0 0
        %583 = vmatpush1.bf16.msra.mxu0 %v575
        %584 = vmatprep.subr.bf16.mxu0 0
        %585 = vmatpush1.bf16.msra.mxu0 %v576
        %586 = vmatprep.subr.bf16.mxu0 0
        %587 = vmatpush1.bf16.msra.mxu0 0
        %588 = vmatprep.subr.bf16.mxu0 0
        %589 = vmatpush1.bf16.msra.mxu0 0
        %590 = vmatprep.subr.bf16.mxu0 0
        %591 = vmatpush1.bf16.msra.mxu0 0
        %592 = vmatprep.subr.bf16.mxu0 0
        %593 = vmatpush1.bf16.msra.mxu0 0
        %594 = vmatprep.subr.bf16.mxu0 0
        %595 = vmatpush1.bf16.msra.mxu0 0
        %596 = vmatprep.subr.bf16.mxu0 0
        %597 = vmatpush1.bf16.msra.mxu0 0
        %598 = vmatprep.subr.bf16.mxu0 0
        %599 = vmatpush1.bf16.msra.mxu0 0
        %600 = vmatprep.subr.bf16.mxu0 0
        %601 = vmatpush1.bf16.msra.mxu0 0
        %602 = vmatprep.subr.bf16.mxu0 0
        %603 = vmatpush1.bf16.msra.mxu0 0
        %604 = vmatprep.subr.bf16.mxu0 0
        %605 = vmatpush1.bf16.msra.mxu0 0
        %606 = vmatprep.subr.bf16.mxu0 0
        %607 = vmatpush1.bf16.msra.mxu0 0
        %608 = vmatprep.subr.bf16.mxu0 0
        %609 = vmatpush1.bf16.msra.mxu0 0
        %610 = vmatprep.subr.bf16.mxu0 0
        %611 = vmatpush1.bf16.msra.mxu0 0
        %612 = vmatprep.subr.bf16.mxu0 0
        %613 = vmatpush1.bf16.msra.mxu0 0
        %614 = vmatprep.mubr.bf16.mxu0 0
        %615 = vmatmul.mubr.bf16.gmra.mrb[0].mxu0 %v580
        %v616 = vpop.f32.mrb[0].mxu0
        %v617 = vadd.f32 %v566, %v616
        %v618 = vpop.f32.mrb[0].mxu0
        %v619 = vpop.f32.mrb[0].mxu0
        %v620 = vpop.f32.mrb[0].mxu0
        %621 = vdwg.mxu0
        %vm622 = vcmask 253952
        %623 = vst.msk [vmem:[%s347] sm:$0x1] %vm622, %v617
        %s624 = sand.u32 %s212, 1
        %s625 = scalar_lea.sflag [#allocation4], %s624
        %s626 = sand.u32 %s212, 1
        %s627 = scalar_lea.vmem [#allocation7], %s626
        // Predicated region
        $region61: #{tpu_custom_call.1} parent=51 // pred_check
          %p628 = pneg %p222
        $region62: #{tpu_custom_call.1} parent=51 // pred_check_branch
          %630 = sbr.rel (%p628) target = $region64
        $region63: #{tpu_custom_call.1} parent=51 // pred_region
          %s632 = ssub.s32 16, 16
          %633 = vsyncadd %s625, %s632
          %s634 = smul.addr %s26, 16
          %s635 = scalar_lea.hbm %s8, %s634
          %s637 = sshll.u32 %s627, 4
          %s638 = int_to_ptr.vmem [resolvable:$true] %s637
          %640 = dma.vmem_to_hbm [thread:$0]  %s638, 16, %s635, %s625
        $region64: #{tpu_custom_call.1} parent=51 // pred_fallthru
          _
      $region52: #{tpu_custom_call.1} parent=5 // pred_fallthru
        _
      %p641 = scmp.le.s32.totalorder 2, %s21
      // Predicated region
      $region65: #{tpu_custom_call.1} parent=5 // pred_check
        %p642 = pneg %p641
      $region66: #{tpu_custom_call.1} parent=5 // pred_check_branch
        %644 = sbr.rel (%p642) target = $region68
      $region67: #{tpu_custom_call.1} parent=5 // pred_region
        %s645 = ssub.s32 %s21, 2
        // Predicated region
        $region69: #{tpu_custom_call.1} parent=67 // pred_check
          %p646 = pneg %p228
        $region70: #{tpu_custom_call.1} parent=67 // pred_check_branch
          %648 = sbr.rel (%p646) target = $region72
        $region71: #{tpu_custom_call.1} parent=67 // pred_region
          %s649 = sand.u32 %s213, 1
          %s650 = scalar_lea.sflag [#allocation4], %s649
          %s651 = sand.u32 %s213, 1
          %s652 = scalar_lea.vmem [#allocation7], %s651
          %653 = dma.done %s650, 16
        $region72: #{tpu_custom_call.1} parent=67 // pred_fallthru
          _
      $region68: #{tpu_custom_call.1} parent=5 // pred_fallthru
        _
    $region6: #{tpu_custom_call.1} parent=1 // loop_footer
      %s25 = sadd.s32 1, %s21
    $region7: #{tpu_custom_call.1} parent=1 // loop_footer_branch
      %20 = sbr.rel target = $region3
    $region8: #{tpu_custom_call.1} parent=1 // loop_exit
      _
    %654 = vsyncpa [#allocation3], 1
    %s655 = scalar_lea.sflag [#allocation3], 1
    %656 = vsyncpa %s655, 1
    %657 = vsyncpa [#allocation6], 1
    %658 = vsyncpa [#allocation4], 1
    %s659 = scalar_lea.sflag [#allocation4], 1
    %660 = vsyncpa %s659, 1

</llo_original>
